<compile_context>
chip_gen: v7x
topology: tpu7x:2x2x1
jax: 0.10.0
libtpu: 0.0.40
codegen_flags: <defaults>
</compile_context>

<pallas_src>
import jax
import jax.numpy as jnp
from jax.experimental import pallas as pl
from jax.experimental.pallas import tpu as pltpu


def lstm_classifier_kernel(tok_ref, ep_ref, whh_ref, wd_ref, bd_ref, out_ref):
    """tok_ref: (T,) int32 tokens in SMEM (scalar prefetch);
    ep_ref:  (V, 4H) f32 folded table  embedding @ W_ih.T + (b_ih + b_hh);
    whh_ref: (H, 4H) bf16 recurrent weights (pre-transposed);
    wd_ref:  (1, H)  f32  w_out[0] - w_out[1];
    bd_ref:  (1, 1)  f32  b_out[0] - b_out[1];
    out_ref: (1, 2)  f32  softmax probabilities."""
    T = tok_ref.shape[0]
    V = ep_ref.shape[0]
    H = whh_ref.shape[0]

    whh = whh_ref[...]                                           # (H, 4H) bf16

    h = jnp.zeros((1, H), jnp.float32)
    c = jnp.zeros((1, H), jnp.float32)

    # Fully-unrolled recurrence (T static).  Per step the serial chain is:
    # one (1,H)@(H,4H) bf16 MXU push, two full-width EUP ops + tanh(c), and
    # the f32 VPU gate math.  Gate order is PyTorch's (i, f, g, o).
    for t in range(T):
        # Clamped dynamic row gather from the folded (V, 4H) table: a full
        # 128-lane unmasked load that already contains the input projection
        # and both biases.
        tok = jnp.minimum(jnp.maximum(tok_ref[t], 0), V - 1)
        x_pre = ep_ref[pl.ds(tok, 1), :]                         # (1, 4H) f32

        gates = x_pre + jnp.dot(h.astype(jnp.bfloat16), whh,
                                preferred_element_type=jnp.float32)  # (1, 4H)

        # One full-width sigmoid + one full-width tanh over the whole gate
        # vreg, then slice the lanes we need (2 EUP pushes instead of 4).
        sig = jax.nn.sigmoid(gates)                              # (1, 4H)
        tnh = jnp.tanh(gates)                                    # (1, 4H)
        i_g = sig[:, 0:H]
        f_g = sig[:, H:2 * H]
        g_g = tnh[:, 2 * H:3 * H]
        o_g = sig[:, 3 * H:4 * H]

        c = f_g * c + i_g * g_g
        h = o_g * jnp.tanh(c)

    # Epilogue: softmax over 2 logits == sigmoid(logit0 - logit1).
    d = jnp.sum(h * wd_ref[...], axis=-1, keepdims=True) + bd_ref[...]  # (1,1)
    p0 = jax.nn.sigmoid(d)                                       # (1, 1)
    out_ref[...] = jnp.concatenate([p0, 1.0 - p0], axis=-1)      # (1, 2)


def rnn_classifier_forward(tokens, params):
    """tokens: int32 (T,). Returns softmax probabilities of shape (2,)."""
    emb_proj = params["emb_proj"]      # (V, 4H) f32
    whh = params["w_hh_t"]             # (H, 4H) bf16
    w_diff = params["w_diff"]          # (1, H)  f32
    b_diff = params["b_diff"]          # (1, 1)  f32

    V, G = emb_proj.shape
    H = whh.shape[0]

    grid_spec = pltpu.PrefetchScalarGridSpec(
        num_scalar_prefetch=1,
        grid=(1,),
        in_specs=[
            pl.BlockSpec((V, G), lambda i, tok: (0, 0)),
            pl.BlockSpec((H, G), lambda i, tok: (0, 0)),
            pl.BlockSpec((1, H), lambda i, tok: (0, 0)),
            pl.BlockSpec((1, 1), lambda i, tok: (0, 0)),
        ],
        out_specs=pl.BlockSpec((1, 2), lambda i, tok: (0, 0)),
    )

    out = pl.pallas_call(
        lstm_classifier_kernel,
        out_shape=jax.ShapeDtypeStruct((1, 2), jnp.float32),
        grid_spec=grid_spec,
        compiler_params=pltpu.CompilerParams(
            dimension_semantics=("arbitrary",)),
    )(tokens.astype(jnp.int32), emb_proj, whh, w_diff, b_diff)
    return out[0]


def init_params(key, dict_size, input_size, hidden_size):
    """Mirrors the PyTorch module's init.  All folding / transposing /
    bf16-casting is done ONCE here so the traced forward is a single
    pallas_call with no per-call preprocessing."""
    ks = jax.random.split(key, 7)
    bound = 1.0 / (hidden_size ** 0.5)

    # nn.Embedding default init: N(0, 1)
    embedding = jax.random.normal(ks[0], (dict_size, input_size), jnp.float32)
    # LSTM weights in PyTorch shapes, uniform(-1/sqrt(H), 1/sqrt(H))
    w_ih = jax.random.uniform(ks[1], (4 * hidden_size, input_size),
                              jnp.float32, -bound, bound)
    w_hh = jax.random.uniform(ks[2], (4 * hidden_size, hidden_size),
                              jnp.float32, -bound, bound)
    b_ih = jax.random.uniform(ks[3], (4 * hidden_size,), jnp.float32, -bound, bound)
    b_hh = jax.random.uniform(ks[4], (4 * hidden_size,), jnp.float32, -bound, bound)
    # nn.Linear(hidden_size, 2) default init
    w_out = jax.random.uniform(ks[5], (2, hidden_size), jnp.float32,
                               -bound, bound)
    b_out = jax.random.uniform(ks[6], (2,), jnp.float32, -bound, bound)

    # Folded embedding + input projection + combined bias: (V, 4H).
    emb_proj = embedding @ w_ih.T + (b_ih + b_hh)[None, :]
    # Logit-difference form of the final Linear(H, 2) + softmax.
    w_diff = (w_out[0] - w_out[1]).reshape(1, hidden_size)
    b_diff = (b_out[0] - b_out[1]).reshape(1, 1)

    return {
        # Kernel inputs
        "emb_proj": emb_proj.astype(jnp.float32),                # (V, 4H)
        "w_hh_t": w_hh.T.astype(jnp.bfloat16),                   # (H, 4H) bf16
        "w_diff": w_diff.astype(jnp.float32),                    # (1, H)
        "b_diff": b_diff.astype(jnp.float32),                    # (1, 1)
        # Raw weights kept only for the pure-JAX reference check
        "embedding": embedding, "w_ih": w_ih, "w_hh": w_hh,
        "b_ih": b_ih, "b_hh": b_hh, "w_out": w_out, "b_out": b_out,
    }


def reference_forward(tokens, params):
    """Pure-JAX, full-f32 reference with the original module's math."""
    x = params["embedding"][tokens]                               # (T, D)
    H = params["w_hh"].shape[1]
    b = params["b_ih"] + params["b_hh"]
    h = jnp.zeros((H,), jnp.float32)
    c = jnp.zeros((H,), jnp.float32)
    for t in range(x.shape[0]):
        gates = params["w_ih"] @ x[t] + params["w_hh"] @ h + b
        i_g = jax.nn.sigmoid(gates[0:H])
        f_g = jax.nn.sigmoid(gates[H:2 * H])
        g_g = jnp.tanh(gates[2 * H:3 * H])
        o_g = jax.nn.sigmoid(gates[3 * H:4 * H])
        c = f_g * c + i_g * g_g
        h = o_g * jnp.tanh(c)
    logits = params["w_out"] @ h + params["b_out"]
    return jax.nn.softmax(logits)


if __name__ == "__main__":
    dict_size = 27      # small character vocab
    input_size = 32     # embedding dim D
    hidden_size = 32    # LSTM hidden H  (4H = 128 -> lane-dense gate tile)
    seq_len = 8         # T

    key = jax.random.PRNGKey(0)
    k_tok, k_par = jax.random.split(key)
    params = init_params(k_par, dict_size, input_size, hidden_size)
    tokens = jax.random.randint(k_tok, (seq_len,), 0, dict_size, dtype=jnp.int32)

    probs = rnn_classifier_forward(tokens, params)
    probs = jax.block_until_ready(probs)

    ref = reference_forward(tokens, params)
    assert probs.shape == (2,)
    # bf16 recurrent-matmul operands vs f32 reference -> loosened tolerance.
    assert jnp.allclose(probs, ref, atol=1e-2, rtol=1e-2), (probs, ref)

    print("KERNEL_OK")
</pallas_src>

<mosaic_0001>
module attributes {stable_mosaic.version = 11 : i64} {
  func.func @lstm_classifier_kernel(%arg0: i32, %arg1: memref<8xi32, #tpu.memory_space<smem>>, %arg2: memref<27x128xf32, #tpu.memory_space<vmem>>, %arg3: memref<32x128xbf16, #tpu.memory_space<vmem>>, %arg4: memref<1x32xf32, #tpu.memory_space<vmem>>, %arg5: memref<1x1xf32, #tpu.memory_space<vmem>>, %arg6: memref<1x2xf32, #tpu.memory_space<vmem>>) attributes {dimension_semantics = [#tpu.dimension_semantics<arbitrary>], iteration_bounds = array<i64: 1>, scalar_prefetch = 1 : i64, scratch_operands = 0 : i64, tpu.core_type = #tpu.core_type<tc>, window_params = [{pipeline_mode = #tpu.pipeline_mode<synchronous>, transform_indices = @transform_0, window_bounds = array<i64: 27, 128>}, {pipeline_mode = #tpu.pipeline_mode<synchronous>, transform_indices = @transform_1, window_bounds = array<i64: 32, 128>}, {pipeline_mode = #tpu.pipeline_mode<synchronous>, transform_indices = @transform_2, window_bounds = array<i64: 1, 32>}, {pipeline_mode = #tpu.pipeline_mode<synchronous>, transform_indices = @transform_3, window_bounds = array<i64: 1, 1>}, {pipeline_mode = #tpu.pipeline_mode<synchronous>, transform_indices = @transform_4, window_bounds = array<i64: 1, 2>}]} {
    %c0 = arith.constant 0 : index
    %c0_0 = arith.constant 0 : index
    %0 = vector.load %arg3[%c0, %c0_0] : memref<32x128xbf16, #tpu.memory_space<vmem>>, vector<32x128xbf16>
    %cst = arith.constant 0.000000e+00 : f32
    %1 = vector.broadcast %cst : f32 to vector<1x32xf32>
    %cst_1 = arith.constant 0.000000e+00 : f32
    %2 = vector.broadcast %cst_1 : f32 to vector<1x32xf32>
    %c0_2 = arith.constant 0 : index
    %3 = memref.load %arg1[%c0_2] : memref<8xi32, #tpu.memory_space<smem>>
    %c0_i32 = arith.constant 0 : i32
    %4 = arith.maxsi %3, %c0_i32 : i32
    %c26_i32 = arith.constant 26 : i32
    %5 = arith.minsi %4, %c26_i32 : i32
    %6 = arith.index_cast %5 : i32 to index
    %c0_3 = arith.constant 0 : index
    %7 = vector.load %arg2[%6, %c0_3] : memref<27x128xf32, #tpu.memory_space<vmem>>, vector<1x128xf32>
    %8 = arith.truncf %1 : vector<1x32xf32> to vector<1x32xbf16>
    %cst_4 = arith.constant dense<0.000000e+00> : vector<1x128xf32>
    %9 = tpu.matmul %8, %0, %cst_4 {dimension_numbers = #tpu.dot_dimension_numbers<[1], [0], [0], [1], [0, 0, 1, 1], [], []>} : vector<1x32xbf16>, vector<32x128xbf16>, vector<1x128xf32> -> vector<1x128xf32>
    %10 = arith.addf %7, %9 : vector<1x128xf32>
    %11 = arith.negf %10 : vector<1x128xf32>
    %12 = math.exp %11 : vector<1x128xf32>
    %cst_5 = arith.constant 1.000000e+00 : f32
    %13 = vector.broadcast %cst_5 : f32 to vector<1x128xf32>
    %14 = arith.addf %13, %12 : vector<1x128xf32>
    %15 = arith.divf %13, %14 : vector<1x128xf32>
    %16 = math.tanh %10 : vector<1x128xf32>
    %17 = vector.extract_strided_slice %15 {offsets = [0, 0], sizes = [1, 32], strides = [1, 1]} : vector<1x128xf32> to vector<1x32xf32>
    %18 = vector.extract_strided_slice %15 {offsets = [0, 32], sizes = [1, 32], strides = [1, 1]} : vector<1x128xf32> to vector<1x32xf32>
    %19 = vector.extract_strided_slice %16 {offsets = [0, 64], sizes = [1, 32], strides = [1, 1]} : vector<1x128xf32> to vector<1x32xf32>
    %20 = vector.extract_strided_slice %15 {offsets = [0, 96], sizes = [1, 32], strides = [1, 1]} : vector<1x128xf32> to vector<1x32xf32>
    %21 = arith.mulf %18, %2 : vector<1x32xf32>
    %22 = arith.mulf %17, %19 : vector<1x32xf32>
    %23 = arith.addf %21, %22 : vector<1x32xf32>
    %24 = math.tanh %23 : vector<1x32xf32>
    %25 = arith.mulf %20, %24 : vector<1x32xf32>
    %c1 = arith.constant 1 : index
    %26 = memref.load %arg1[%c1] : memref<8xi32, #tpu.memory_space<smem>>
    %c0_i32_6 = arith.constant 0 : i32
    %27 = arith.maxsi %26, %c0_i32_6 : i32
    %c26_i32_7 = arith.constant 26 : i32
    %28 = arith.minsi %27, %c26_i32_7 : i32
    %29 = arith.index_cast %28 : i32 to index
    %c0_8 = arith.constant 0 : index
    %30 = vector.load %arg2[%29, %c0_8] : memref<27x128xf32, #tpu.memory_space<vmem>>, vector<1x128xf32>
    %31 = arith.truncf %25 : vector<1x32xf32> to vector<1x32xbf16>
    %cst_9 = arith.constant dense<0.000000e+00> : vector<1x128xf32>
    %32 = tpu.matmul %31, %0, %cst_9 {dimension_numbers = #tpu.dot_dimension_numbers<[1], [0], [0], [1], [0, 0, 1, 1], [], []>} : vector<1x32xbf16>, vector<32x128xbf16>, vector<1x128xf32> -> vector<1x128xf32>
    %33 = arith.addf %30, %32 : vector<1x128xf32>
    %34 = arith.negf %33 : vector<1x128xf32>
    %35 = math.exp %34 : vector<1x128xf32>
    %cst_10 = arith.constant 1.000000e+00 : f32
    %36 = vector.broadcast %cst_10 : f32 to vector<1x128xf32>
    %37 = arith.addf %36, %35 : vector<1x128xf32>
    %38 = arith.divf %36, %37 : vector<1x128xf32>
    %39 = math.tanh %33 : vector<1x128xf32>
    %40 = vector.extract_strided_slice %38 {offsets = [0, 0], sizes = [1, 32], strides = [1, 1]} : vector<1x128xf32> to vector<1x32xf32>
    %41 = vector.extract_strided_slice %38 {offsets = [0, 32], sizes = [1, 32], strides = [1, 1]} : vector<1x128xf32> to vector<1x32xf32>
    %42 = vector.extract_strided_slice %39 {offsets = [0, 64], sizes = [1, 32], strides = [1, 1]} : vector<1x128xf32> to vector<1x32xf32>
    %43 = vector.extract_strided_slice %38 {offsets = [0, 96], sizes = [1, 32], strides = [1, 1]} : vector<1x128xf32> to vector<1x32xf32>
    %44 = arith.mulf %41, %23 : vector<1x32xf32>
    %45 = arith.mulf %40, %42 : vector<1x32xf32>
    %46 = arith.addf %44, %45 : vector<1x32xf32>
    %47 = math.tanh %46 : vector<1x32xf32>
    %48 = arith.mulf %43, %47 : vector<1x32xf32>
    %c2 = arith.constant 2 : index
    %49 = memref.load %arg1[%c2] : memref<8xi32, #tpu.memory_space<smem>>
    %c0_i32_11 = arith.constant 0 : i32
    %50 = arith.maxsi %49, %c0_i32_11 : i32
    %c26_i32_12 = arith.constant 26 : i32
    %51 = arith.minsi %50, %c26_i32_12 : i32
    %52 = arith.index_cast %51 : i32 to index
    %c0_13 = arith.constant 0 : index
    %53 = vector.load %arg2[%52, %c0_13] : memref<27x128xf32, #tpu.memory_space<vmem>>, vector<1x128xf32>
    %54 = arith.truncf %48 : vector<1x32xf32> to vector<1x32xbf16>
    %cst_14 = arith.constant dense<0.000000e+00> : vector<1x128xf32>
    %55 = tpu.matmul %54, %0, %cst_14 {dimension_numbers = #tpu.dot_dimension_numbers<[1], [0], [0], [1], [0, 0, 1, 1], [], []>} : vector<1x32xbf16>, vector<32x128xbf16>, vector<1x128xf32> -> vector<1x128xf32>
    %56 = arith.addf %53, %55 : vector<1x128xf32>
    %57 = arith.negf %56 : vector<1x128xf32>
    %58 = math.exp %57 : vector<1x128xf32>
    %cst_15 = arith.constant 1.000000e+00 : f32
    %59 = vector.broadcast %cst_15 : f32 to vector<1x128xf32>
    %60 = arith.addf %59, %58 : vector<1x128xf32>
    %61 = arith.divf %59, %60 : vector<1x128xf32>
    %62 = math.tanh %56 : vector<1x128xf32>
    %63 = vector.extract_strided_slice %61 {offsets = [0, 0], sizes = [1, 32], strides = [1, 1]} : vector<1x128xf32> to vector<1x32xf32>
    %64 = vector.extract_strided_slice %61 {offsets = [0, 32], sizes = [1, 32], strides = [1, 1]} : vector<1x128xf32> to vector<1x32xf32>
    %65 = vector.extract_strided_slice %62 {offsets = [0, 64], sizes = [1, 32], strides = [1, 1]} : vector<1x128xf32> to vector<1x32xf32>
    %66 = vector.extract_strided_slice %61 {offsets = [0, 96], sizes = [1, 32], strides = [1, 1]} : vector<1x128xf32> to vector<1x32xf32>
    %67 = arith.mulf %64, %46 : vector<1x32xf32>
    %68 = arith.mulf %63, %65 : vector<1x32xf32>
    %69 = arith.addf %67, %68 : vector<1x32xf32>
    %70 = math.tanh %69 : vector<1x32xf32>
    %71 = arith.mulf %66, %70 : vector<1x32xf32>
    %c3 = arith.constant 3 : index
    %72 = memref.load %arg1[%c3] : memref<8xi32, #tpu.memory_space<smem>>
    %c0_i32_16 = arith.constant 0 : i32
    %73 = arith.maxsi %72, %c0_i32_16 : i32
    %c26_i32_17 = arith.constant 26 : i32
    %74 = arith.minsi %73, %c26_i32_17 : i32
    %75 = arith.index_cast %74 : i32 to index
    %c0_18 = arith.constant 0 : index
    %76 = vector.load %arg2[%75, %c0_18] : memref<27x128xf32, #tpu.memory_space<vmem>>, vector<1x128xf32>
    %77 = arith.truncf %71 : vector<1x32xf32> to vector<1x32xbf16>
    %cst_19 = arith.constant dense<0.000000e+00> : vector<1x128xf32>
    %78 = tpu.matmul %77, %0, %cst_19 {dimension_numbers = #tpu.dot_dimension_numbers<[1], [0], [0], [1], [0, 0, 1, 1], [], []>} : vector<1x32xbf16>, vector<32x128xbf16>, vector<1x128xf32> -> vector<1x128xf32>
    %79 = arith.addf %76, %78 : vector<1x128xf32>
    %80 = arith.negf %79 : vector<1x128xf32>
    %81 = math.exp %80 : vector<1x128xf32>
    %cst_20 = arith.constant 1.000000e+00 : f32
    %82 = vector.broadcast %cst_20 : f32 to vector<1x128xf32>
    %83 = arith.addf %82, %81 : vector<1x128xf32>
    %84 = arith.divf %82, %83 : vector<1x128xf32>
    %85 = math.tanh %79 : vector<1x128xf32>
    %86 = vector.extract_strided_slice %84 {offsets = [0, 0], sizes = [1, 32], strides = [1, 1]} : vector<1x128xf32> to vector<1x32xf32>
    %87 = vector.extract_strided_slice %84 {offsets = [0, 32], sizes = [1, 32], strides = [1, 1]} : vector<1x128xf32> to vector<1x32xf32>
    %88 = vector.extract_strided_slice %85 {offsets = [0, 64], sizes = [1, 32], strides = [1, 1]} : vector<1x128xf32> to vector<1x32xf32>
    %89 = vector.extract_strided_slice %84 {offsets = [0, 96], sizes = [1, 32], strides = [1, 1]} : vector<1x128xf32> to vector<1x32xf32>
    %90 = arith.mulf %87, %69 : vector<1x32xf32>
    %91 = arith.mulf %86, %88 : vector<1x32xf32>
    %92 = arith.addf %90, %91 : vector<1x32xf32>
    %93 = math.tanh %92 : vector<1x32xf32>
    %94 = arith.mulf %89, %93 : vector<1x32xf32>
    %c4 = arith.constant 4 : index
    %95 = memref.load %arg1[%c4] : memref<8xi32, #tpu.memory_space<smem>>
    %c0_i32_21 = arith.constant 0 : i32
    %96 = arith.maxsi %95, %c0_i32_21 : i32
    %c26_i32_22 = arith.constant 26 : i32
    %97 = arith.minsi %96, %c26_i32_22 : i32
    %98 = arith.index_cast %97 : i32 to index
    %c0_23 = arith.constant 0 : index
    %99 = vector.load %arg2[%98, %c0_23] : memref<27x128xf32, #tpu.memory_space<vmem>>, vector<1x128xf32>
    %100 = arith.truncf %94 : vector<1x32xf32> to vector<1x32xbf16>
    %cst_24 = arith.constant dense<0.000000e+00> : vector<1x128xf32>
    %101 = tpu.matmul %100, %0, %cst_24 {dimension_numbers = #tpu.dot_dimension_numbers<[1], [0], [0], [1], [0, 0, 1, 1], [], []>} : vector<1x32xbf16>, vector<32x128xbf16>, vector<1x128xf32> -> vector<1x128xf32>
    %102 = arith.addf %99, %101 : vector<1x128xf32>
    %103 = arith.negf %102 : vector<1x128xf32>
    %104 = math.exp %103 : vector<1x128xf32>
    %cst_25 = arith.constant 1.000000e+00 : f32
    %105 = vector.broadcast %cst_25 : f32 to vector<1x128xf32>
    %106 = arith.addf %105, %104 : vector<1x128xf32>
    %107 = arith.divf %105, %106 : vector<1x128xf32>
    %108 = math.tanh %102 : vector<1x128xf32>
    %109 = vector.extract_strided_slice %107 {offsets = [0, 0], sizes = [1, 32], strides = [1, 1]} : vector<1x128xf32> to vector<1x32xf32>
    %110 = vector.extract_strided_slice %107 {offsets = [0, 32], sizes = [1, 32], strides = [1, 1]} : vector<1x128xf32> to vector<1x32xf32>
    %111 = vector.extract_strided_slice %108 {offsets = [0, 64], sizes = [1, 32], strides = [1, 1]} : vector<1x128xf32> to vector<1x32xf32>
    %112 = vector.extract_strided_slice %107 {offsets = [0, 96], sizes = [1, 32], strides = [1, 1]} : vector<1x128xf32> to vector<1x32xf32>
    %113 = arith.mulf %110, %92 : vector<1x32xf32>
    %114 = arith.mulf %109, %111 : vector<1x32xf32>
    %115 = arith.addf %113, %114 : vector<1x32xf32>
    %116 = math.tanh %115 : vector<1x32xf32>
    %117 = arith.mulf %112, %116 : vector<1x32xf32>
    %c5 = arith.constant 5 : index
    %118 = memref.load %arg1[%c5] : memref<8xi32, #tpu.memory_space<smem>>
    %c0_i32_26 = arith.constant 0 : i32
    %119 = arith.maxsi %118, %c0_i32_26 : i32
    %c26_i32_27 = arith.constant 26 : i32
    %120 = arith.minsi %119, %c26_i32_27 : i32
    %121 = arith.index_cast %120 : i32 to index
    %c0_28 = arith.constant 0 : index
    %122 = vector.load %arg2[%121, %c0_28] : memref<27x128xf32, #tpu.memory_space<vmem>>, vector<1x128xf32>
    %123 = arith.truncf %117 : vector<1x32xf32> to vector<1x32xbf16>
    %cst_29 = arith.constant dense<0.000000e+00> : vector<1x128xf32>
    %124 = tpu.matmul %123, %0, %cst_29 {dimension_numbers = #tpu.dot_dimension_numbers<[1], [0], [0], [1], [0, 0, 1, 1], [], []>} : vector<1x32xbf16>, vector<32x128xbf16>, vector<1x128xf32> -> vector<1x128xf32>
    %125 = arith.addf %122, %124 : vector<1x128xf32>
    %126 = arith.negf %125 : vector<1x128xf32>
    %127 = math.exp %126 : vector<1x128xf32>
    %cst_30 = arith.constant 1.000000e+00 : f32
    %128 = vector.broadcast %cst_30 : f32 to vector<1x128xf32>
    %129 = arith.addf %128, %127 : vector<1x128xf32>
    %130 = arith.divf %128, %129 : vector<1x128xf32>
    %131 = math.tanh %125 : vector<1x128xf32>
    %132 = vector.extract_strided_slice %130 {offsets = [0, 0], sizes = [1, 32], strides = [1, 1]} : vector<1x128xf32> to vector<1x32xf32>
    %133 = vector.extract_strided_slice %130 {offsets = [0, 32], sizes = [1, 32], strides = [1, 1]} : vector<1x128xf32> to vector<1x32xf32>
    %134 = vector.extract_strided_slice %131 {offsets = [0, 64], sizes = [1, 32], strides = [1, 1]} : vector<1x128xf32> to vector<1x32xf32>
    %135 = vector.extract_strided_slice %130 {offsets = [0, 96], sizes = [1, 32], strides = [1, 1]} : vector<1x128xf32> to vector<1x32xf32>
    %136 = arith.mulf %133, %115 : vector<1x32xf32>
    %137 = arith.mulf %132, %134 : vector<1x32xf32>
    %138 = arith.addf %136, %137 : vector<1x32xf32>
    %139 = math.tanh %138 : vector<1x32xf32>
    %140 = arith.mulf %135, %139 : vector<1x32xf32>
    %c6 = arith.constant 6 : index
    %141 = memref.load %arg1[%c6] : memref<8xi32, #tpu.memory_space<smem>>
    %c0_i32_31 = arith.constant 0 : i32
    %142 = arith.maxsi %141, %c0_i32_31 : i32
    %c26_i32_32 = arith.constant 26 : i32
    %143 = arith.minsi %142, %c26_i32_32 : i32
    %144 = arith.index_cast %143 : i32 to index
    %c0_33 = arith.constant 0 : index
    %145 = vector.load %arg2[%144, %c0_33] : memref<27x128xf32, #tpu.memory_space<vmem>>, vector<1x128xf32>
    %146 = arith.truncf %140 : vector<1x32xf32> to vector<1x32xbf16>
    %cst_34 = arith.constant dense<0.000000e+00> : vector<1x128xf32>
    %147 = tpu.matmul %146, %0, %cst_34 {dimension_numbers = #tpu.dot_dimension_numbers<[1], [0], [0], [1], [0, 0, 1, 1], [], []>} : vector<1x32xbf16>, vector<32x128xbf16>, vector<1x128xf32> -> vector<1x128xf32>
    %148 = arith.addf %145, %147 : vector<1x128xf32>
    %149 = arith.negf %148 : vector<1x128xf32>
    %150 = math.exp %149 : vector<1x128xf32>
    %cst_35 = arith.constant 1.000000e+00 : f32
    %151 = vector.broadcast %cst_35 : f32 to vector<1x128xf32>
    %152 = arith.addf %151, %150 : vector<1x128xf32>
    %153 = arith.divf %151, %152 : vector<1x128xf32>
    %154 = math.tanh %148 : vector<1x128xf32>
    %155 = vector.extract_strided_slice %153 {offsets = [0, 0], sizes = [1, 32], strides = [1, 1]} : vector<1x128xf32> to vector<1x32xf32>
    %156 = vector.extract_strided_slice %153 {offsets = [0, 32], sizes = [1, 32], strides = [1, 1]} : vector<1x128xf32> to vector<1x32xf32>
    %157 = vector.extract_strided_slice %154 {offsets = [0, 64], sizes = [1, 32], strides = [1, 1]} : vector<1x128xf32> to vector<1x32xf32>
    %158 = vector.extract_strided_slice %153 {offsets = [0, 96], sizes = [1, 32], strides = [1, 1]} : vector<1x128xf32> to vector<1x32xf32>
    %159 = arith.mulf %156, %138 : vector<1x32xf32>
    %160 = arith.mulf %155, %157 : vector<1x32xf32>
    %161 = arith.addf %159, %160 : vector<1x32xf32>
    %162 = math.tanh %161 : vector<1x32xf32>
    %163 = arith.mulf %158, %162 : vector<1x32xf32>
    %c7 = arith.constant 7 : index
    %164 = memref.load %arg1[%c7] : memref<8xi32, #tpu.memory_space<smem>>
    %c0_i32_36 = arith.constant 0 : i32
    %165 = arith.maxsi %164, %c0_i32_36 : i32
    %c26_i32_37 = arith.constant 26 : i32
    %166 = arith.minsi %165, %c26_i32_37 : i32
    %167 = arith.index_cast %166 : i32 to index
    %c0_38 = arith.constant 0 : index
    %168 = vector.load %arg2[%167, %c0_38] : memref<27x128xf32, #tpu.memory_space<vmem>>, vector<1x128xf32>
    %169 = arith.truncf %163 : vector<1x32xf32> to vector<1x32xbf16>
    %cst_39 = arith.constant dense<0.000000e+00> : vector<1x128xf32>
    %170 = tpu.matmul %169, %0, %cst_39 {dimension_numbers = #tpu.dot_dimension_numbers<[1], [0], [0], [1], [0, 0, 1, 1], [], []>} : vector<1x32xbf16>, vector<32x128xbf16>, vector<1x128xf32> -> vector<1x128xf32>
    %171 = arith.addf %168, %170 : vector<1x128xf32>
    %172 = arith.negf %171 : vector<1x128xf32>
    %173 = math.exp %172 : vector<1x128xf32>
    %cst_40 = arith.constant 1.000000e+00 : f32
    %174 = vector.broadcast %cst_40 : f32 to vector<1x128xf32>
    %175 = arith.addf %174, %173 : vector<1x128xf32>
    %176 = arith.divf %174, %175 : vector<1x128xf32>
    %177 = math.tanh %171 : vector<1x128xf32>
    %178 = vector.extract_strided_slice %176 {offsets = [0, 0], sizes = [1, 32], strides = [1, 1]} : vector<1x128xf32> to vector<1x32xf32>
    %179 = vector.extract_strided_slice %176 {offsets = [0, 32], sizes = [1, 32], strides = [1, 1]} : vector<1x128xf32> to vector<1x32xf32>
    %180 = vector.extract_strided_slice %177 {offsets = [0, 64], sizes = [1, 32], strides = [1, 1]} : vector<1x128xf32> to vector<1x32xf32>
    %181 = vector.extract_strided_slice %176 {offsets = [0, 96], sizes = [1, 32], strides = [1, 1]} : vector<1x128xf32> to vector<1x32xf32>
    %182 = arith.mulf %179, %161 : vector<1x32xf32>
    %183 = arith.mulf %178, %180 : vector<1x32xf32>
    %184 = arith.addf %182, %183 : vector<1x32xf32>
    %185 = math.tanh %184 : vector<1x32xf32>
    %186 = arith.mulf %181, %185 : vector<1x32xf32>
    %c0_41 = arith.constant 0 : index
    %c0_42 = arith.constant 0 : index
    %187 = vector.load %arg4[%c0_41, %c0_42] : memref<1x32xf32, #tpu.memory_space<vmem>>, vector<1x32xf32>
    %188 = arith.mulf %186, %187 : vector<1x32xf32>
    %cst_43 = arith.constant dense<0.000000e+00> : vector<1xf32>
    %189 = vector.multi_reduction <add>, %188, %cst_43 [1] : vector<1x32xf32> to vector<1xf32>
    %190 = vector.shape_cast %189 : vector<1xf32> to vector<1x1xf32>
    %c0_44 = arith.constant 0 : index
    %c0_45 = arith.constant 0 : index
    %191 = vector.load %arg5[%c0_44, %c0_45] : memref<1x1xf32, #tpu.memory_space<vmem>>, vector<1x1xf32>
    %192 = arith.addf %190, %191 : vector<1x1xf32>
    %193 = arith.negf %192 : vector<1x1xf32>
    %194 = math.exp %193 : vector<1x1xf32>
    %cst_46 = arith.constant 1.000000e+00 : f32
    %195 = vector.broadcast %cst_46 : f32 to vector<1x1xf32>
    %196 = arith.addf %195, %194 : vector<1x1xf32>
    %197 = arith.divf %195, %196 : vector<1x1xf32>
    %cst_47 = arith.constant 1.000000e+00 : f32
    %198 = vector.broadcast %cst_47 : f32 to vector<1x1xf32>
    %199 = arith.subf %198, %197 : vector<1x1xf32>
    %200 = tpu.concatenate %197, %199 in 1 : vector<1x1xf32>, vector<1x1xf32> -> vector<1x2xf32>
    %c0_48 = arith.constant 0 : index
    %c0_49 = arith.constant 0 : index
    %201 = vector.load %arg6[%c0_48, %c0_49] : memref<1x2xf32, #tpu.memory_space<vmem>>, vector<1x2xf32>
    tpu.vector_store %arg6[%c0_48, %c0_49], %200 {strides = array<i32>} : memref<1x2xf32, #tpu.memory_space<vmem>>, vector<1x2xf32>,
    return
  }
  func.func @transform_0(%arg0: i32, %arg1: memref<8xi32, #tpu.memory_space<smem>>) -> (i32, i32) {
    %c0_i32 = arith.constant 0 : i32
    %c0_i32_0 = arith.constant 0 : i32
    %c0_i32_1 = arith.constant 0 : i32
    return %c0_i32, %c0_i32_0 : i32, i32
  }
  func.func @transform_1(%arg0: i32, %arg1: memref<8xi32, #tpu.memory_space<smem>>) -> (i32, i32) {
    %c0_i32 = arith.constant 0 : i32
    %c0_i32_0 = arith.constant 0 : i32
    %c0_i32_1 = arith.constant 0 : i32
    return %c0_i32, %c0_i32_0 : i32, i32
  }
  func.func @transform_2(%arg0: i32, %arg1: memref<8xi32, #tpu.memory_space<smem>>) -> (i32, i32) {
    %c0_i32 = arith.constant 0 : i32
    %c0_i32_0 = arith.constant 0 : i32
    %c0_i32_1 = arith.constant 0 : i32
    return %c0_i32, %c0_i32_0 : i32, i32
  }
  func.func @transform_3(%arg0: i32, %arg1: memref<8xi32, #tpu.memory_space<smem>>) -> (i32, i32) {
    %c0_i32 = arith.constant 0 : i32
    %c0_i32_0 = arith.constant 0 : i32
    %c0_i32_1 = arith.constant 0 : i32
    return %c0_i32, %c0_i32_0 : i32, i32
  }
  func.func @transform_4(%arg0: i32, %arg1: memref<8xi32, #tpu.memory_space<smem>>) -> (i32, i32) {
    %c0_i32 = arith.constant 0 : i32
    %c0_i32_0 = arith.constant 0 : i32
    %c0_i32_1 = arith.constant 0 : i32
    return %c0_i32, %c0_i32_0 : i32, i32
  }
}

</mosaic_0001>

<llo_original>
// kernel: tpu_custom_call.1
$region0: #{tpu_custom_call.1}
  #allocation0 [shape = 'u32[]', space=smem, size = 0x4, offset = 0x4, fixed_abs, tag = 'smem constant byte address 0x4 - core index']
  #allocation1 [shape = 'u32[144,128]{1,0:T(1,128)}', space=vmem, size = 0x12000, scoped, tag = 'internal scratch']
  #allocation2 [shape = 's32[1]{0}', space=sflag, size = 0x4, scoped, tag = 'scoped memory for tpu_custom_call.1']
  #allocation3 [shape = 'u8[512]{0}', space=smem, size = 0x200, scoped, tag = 'prefetched SMEM operand 0']
  #allocation4 [shape = 'f32[1,1]{1,0:T(1,128)S(1)}', space=vmem, size = 0x200, scoped, tag = 'scoped memory for tpu_custom_call.1']
  %s0 = inlined_call_operand.vmem [shape: s32[8], index: 0, kind: input, shape index: {}]
  %s1 = inlined_call_operand.hbm [shape: f32[27,128], index: 1, kind: input, shape index: {}]
  %s2 = inlined_call_operand.hbm [shape: bf16[32,128], index: 2, kind: input, shape index: {}]
  %s3 = inlined_call_operand.vmem [shape: f32[1,32], index: 3, kind: input, shape index: {}]
  %s4 = inlined_call_operand.<no memory space> [shape: f32[1,1], index: 4, kind: input, shape index: {}]
  %s5 = inlined_call_operand.hbm [shape: f32[1,2], index: 5, kind: output, shape index: {}]
  %s6 = sld [smem:[#allocation0]]
  $region34: #{tpu_custom_call.1} parent=0
    _
  %s8 = ssub.s32 1, %s6
  %s9 = scalar_select 0, %s8, %s6
  %s10 = sshll.u32 %s0, 4
  %s11 = int_to_ptr.vmem [resolvable:$true] %s10
  %13 = dma.vmem_to_smem %s11, 16, [#allocation3], [#allocation2]
  %v14 = vstv %s4
  %15 = vst [vmem:[#allocation4] sm:$0x1] %v14
  %16 = dma.done [#allocation2], 16
  %17 = sfence
  $region1: #{tpu_custom_call.1} parent=0
    #allocation5 [shape = 'u8[16384]{0}', space=vmem, size = 0x4000, scoped, tag = 'input window, operand 1, single buffered']
    #allocation6 [shape = 's32[1]{0}', space=sflag, size = 0x4, scoped, tag = 'scoped memory for tpu_custom_call.1']
    #allocation7 [shape = 's32[1]{0}', space=sflag, size = 0x4, scoped, tag = 'scoped memory for tpu_custom_call.1']
    #allocation8 [shape = 'u8[8192]{0}', space=vmem, size = 0x2000, scoped, tag = 'input window, operand 2, single buffered']
    #allocation9 [shape = 's32[1]{0}', space=sflag, size = 0x4, scoped, tag = 'scoped memory for tpu_custom_call.1']
    #allocation10 [shape = 'u8[512]{0}', space=vmem, size = 0x400, scoped, tag = 'output window, operand 0, single buffered']
    %18 = vsyncpa [#allocation6], 0
    %19 = vsyncpa [#allocation9], 0
    %20 = vsyncpa [#allocation7], 0
    // Predicated region
    $region2: #{tpu_custom_call.1} parent=1 // pred_check
      _
    $region3: #{tpu_custom_call.1} parent=1 // pred_check_branch
      %22 = sbr.rel (0) target = $region5
    $region4: #{tpu_custom_call.1} parent=1 // pred_region
      %s24 = ssub.s32 512, 512
      %25 = vsyncadd [#allocation6], %s24
      %s26 = sshll.u32 [#allocation5], 4
      %s27 = int_to_ptr.vmem [resolvable:$true] %s26
      %32 = dma.hbm_to_vmem [thread:$0]  %s1, 512, %s27, [#allocation6], 128, 128, 8
    $region5: #{tpu_custom_call.1} parent=1 // pred_fallthru
      _
    // Predicated region
    $region6: #{tpu_custom_call.1} parent=1 // pred_check
      _
    $region7: #{tpu_custom_call.1} parent=1 // pred_check_branch
      %34 = sbr.rel (0) target = $region9
    $region8: #{tpu_custom_call.1} parent=1 // pred_region
      %s36 = ssub.s32 256, 256
      %37 = vsyncadd [#allocation9], %s36
      %s38 = sshll.u32 [#allocation8], 4
      %s39 = int_to_ptr.vmem [resolvable:$true] %s38
      %44 = dma.hbm_to_vmem [thread:$0]  %s2, 256, %s39, [#allocation9], 64, 64, 4
    $region9: #{tpu_custom_call.1} parent=1 // pred_fallthru
      _
    // Predicated region
    $region10: #{tpu_custom_call.1} parent=1 // pred_check
      _
    $region11: #{tpu_custom_call.1} parent=1 // pred_check_branch
      %46 = sbr.rel (0) target = $region13
    $region12: #{tpu_custom_call.1} parent=1 // pred_region
      _
    $region13: #{tpu_custom_call.1} parent=1 // pred_fallthru
      _
    // Predicated region
    $region14: #{tpu_custom_call.1} parent=1 // pred_check
      _
    $region15: #{tpu_custom_call.1} parent=1 // pred_check_branch
      %48 = sbr.rel (0) target = $region17
    $region16: #{tpu_custom_call.1} parent=1 // pred_region
      _
    $region17: #{tpu_custom_call.1} parent=1 // pred_fallthru
      _
    // Predicated region
    $region18: #{tpu_custom_call.1} parent=1 // pred_check
      _
    $region19: #{tpu_custom_call.1} parent=1 // pred_check_branch
      %50 = sbr.rel (0) target = $region21
    $region20: #{tpu_custom_call.1} parent=1 // pred_region
      %51 = dma.done [#allocation6], 512
    $region21: #{tpu_custom_call.1} parent=1 // pred_fallthru
      _
    // Predicated region
    $region22: #{tpu_custom_call.1} parent=1 // pred_check
      _
    $region23: #{tpu_custom_call.1} parent=1 // pred_check_branch
      %53 = sbr.rel (0) target = $region25
    $region24: #{tpu_custom_call.1} parent=1 // pred_region
      %54 = dma.done [#allocation9], 256
    $region25: #{tpu_custom_call.1} parent=1 // pred_fallthru
      _
    %v56 = vld [vmem:[#allocation8] sm:$0xf]
    %v57 = vld [vmem:[#allocation8 + $0x4] sm:$0xf]
    %v58 = vld [vmem:[#allocation8 + $0x8] sm:$0xf]
    %v59 = vld [vmem:[#allocation8 + $0xc] sm:$0xf]
    %s60 = sld [smem:[#allocation3]]
    %p61 = scmp.gt.s32.totalorder %s60, 0
    %s62 = scalar_select %p61, %s60, 0
    %p63 = scmp.lt.s32.totalorder %s62, 26
    %s64 = scalar_select %p63, %s62, 26
    %s65 = scalar_lea.vmem [#allocation5], %s64
    %v66 = vld [vmem:[%s65] sm:$0x1]
    %v71 = vunpack.c.l.b16 %v56
    %v72 = vunpack.c.l.b16 %v57
    %v73 = vunpack.c.l.b16 %v58
    %v74 = vunpack.c.l.b16 %v59
    %v75 = vpack.c.b16 %v72, %v71
    %v76 = vpack.c.b16 %v74, %v73
    %vm79 = vcmask 261120
    %v81 = vsel %vm79, 0, 0
    %83 = vmatprep.subr.bf16.mxu0 0
    %84 = vmatpush1.bf16.msra.mxu0 %v75
    %85 = vmatprep.subr.bf16.mxu0 0
    %86 = vmatpush1.bf16.msra.mxu0 %v76
    %87 = vmatprep.subr.bf16.mxu0 0
    %88 = vmatpush1.bf16.msra.mxu0 0
    %89 = vmatprep.subr.bf16.mxu0 0
    %90 = vmatpush1.bf16.msra.mxu0 0
    %91 = vmatprep.subr.bf16.mxu0 0
    %92 = vmatpush1.bf16.msra.mxu0 0
    %93 = vmatprep.subr.bf16.mxu0 0
    %94 = vmatpush1.bf16.msra.mxu0 0
    %95 = vmatprep.subr.bf16.mxu0 0
    %96 = vmatpush1.bf16.msra.mxu0 0
    %97 = vmatprep.subr.bf16.mxu0 0
    %98 = vmatpush1.bf16.msra.mxu0 0
    %99 = vmatprep.subr.bf16.mxu0 0
    %100 = vmatpush1.bf16.msra.mxu0 0
    %101 = vmatprep.subr.bf16.mxu0 0
    %102 = vmatpush1.bf16.msra.mxu0 0
    %103 = vmatprep.subr.bf16.mxu0 0
    %104 = vmatpush1.bf16.msra.mxu0 0
    %105 = vmatprep.subr.bf16.mxu0 0
    %106 = vmatpush1.bf16.msra.mxu0 0
    %107 = vmatprep.subr.bf16.mxu0 0
    %108 = vmatpush1.bf16.msra.mxu0 0
    %109 = vmatprep.subr.bf16.mxu0 0
    %110 = vmatpush1.bf16.msra.mxu0 0
    %111 = vmatprep.subr.bf16.mxu0 0
    %112 = vmatpush1.bf16.msra.mxu0 0
    %113 = vmatprep.subr.bf16.mxu0 0
    %114 = vmatpush1.bf16.msra.mxu0 0
    %115 = vmatprep.mubr.bf16.mxu0 0
    %116 = vmatmul.mubr.bf16.gmra.mrb[0].mxu0 %v81
    %v117 = vpop.f32.mrb[0].mxu0
    %v118 = vadd.f32 0.0, %v117
    %v119 = vpop.f32.mrb[0].mxu0
    %v120 = vpop.f32.mrb[0].mxu0
    %v121 = vpop.f32.mrb[0].mxu0
    %122 = vdwg.mxu0
    %v123 = vadd.f32 %v66, %v118
    %v124 = vxor.u32 %v123, 2147483648
    %v125 = vmul.f32 %v124, 1.442695
    %v126 = vpow.pop %v125
    %v127 = vadd.f32 %v126, 1.0
    %v128 = vrcp.pop %v127
    %v129 = vmul.f32 1.0, %v128
    %v130 = vtanh.pop %v123
    %v131 = vmul.f32 %v129, 0.0
    %133 = vrot.lane.b32.xlu0 %v130, 64
    %v134 = vpop.permute.xlu0 %133
    %v136 = vmul.f32 %v129, %v134
    %138 = vrot.lane.b32.xlu0 %v136, 32
    %v139 = vpop.permute.xlu0 %138
    %v141 = vadd.f32 %v131, %v139
    %v142 = vtanh.pop %v141
    %144 = vrot.lane.b32.xlu0 %v142, 64
    %v145 = vpop.permute.xlu0 %144
    %v147 = vmul.f32 %v129, %v145
    %s148 = sld [smem:[#allocation3 + $0x1]]
    %p149 = scmp.gt.s32.totalorder %s148, 0
    %s150 = scalar_select %p149, %s148, 0
    %p151 = scmp.lt.s32.totalorder %s150, 26
    %s152 = scalar_select %p151, %s150, 26
    %s153 = scalar_lea.vmem [#allocation5], %s152
    %v154 = vld [vmem:[%s153] sm:$0x1]
    %v155 = vpack.c.bf16 %v147, %v147
    %157 = vrot.lane.b32.xlu0 %v155, 32
    %v158 = vpop.permute.xlu0 %157
    %v160 = vsel %vm79, %v158, 0
    %162 = vmatprep.subr.bf16.mxu0 0
    %163 = vmatpush1.bf16.msra.mxu0 %v75
    %164 = vmatprep.subr.bf16.mxu0 0
    %165 = vmatpush1.bf16.msra.mxu0 %v76
    %166 = vmatprep.subr.bf16.mxu0 0
    %167 = vmatpush1.bf16.msra.mxu0 0
    %168 = vmatprep.subr.bf16.mxu0 0
    %169 = vmatpush1.bf16.msra.mxu0 0
    %170 = vmatprep.subr.bf16.mxu0 0
    %171 = vmatpush1.bf16.msra.mxu0 0
    %172 = vmatprep.subr.bf16.mxu0 0
    %173 = vmatpush1.bf16.msra.mxu0 0
    %174 = vmatprep.subr.bf16.mxu0 0
    %175 = vmatpush1.bf16.msra.mxu0 0
    %176 = vmatprep.subr.bf16.mxu0 0
    %177 = vmatpush1.bf16.msra.mxu0 0
    %178 = vmatprep.subr.bf16.mxu0 0
    %179 = vmatpush1.bf16.msra.mxu0 0
    %180 = vmatprep.subr.bf16.mxu0 0
    %181 = vmatpush1.bf16.msra.mxu0 0
    %182 = vmatprep.subr.bf16.mxu0 0
    %183 = vmatpush1.bf16.msra.mxu0 0
    %184 = vmatprep.subr.bf16.mxu0 0
    %185 = vmatpush1.bf16.msra.mxu0 0
    %186 = vmatprep.subr.bf16.mxu0 0
    %187 = vmatpush1.bf16.msra.mxu0 0
    %188 = vmatprep.subr.bf16.mxu0 0
    %189 = vmatpush1.bf16.msra.mxu0 0
    %190 = vmatprep.subr.bf16.mxu0 0
    %191 = vmatpush1.bf16.msra.mxu0 0
    %192 = vmatprep.subr.bf16.mxu0 0
    %193 = vmatpush1.bf16.msra.mxu0 0
    %194 = vmatprep.mubr.bf16.mxu0 0
    %195 = vmatmul.mubr.bf16.gmra.mrb[0].mxu0 %v160
    %v196 = vpop.f32.mrb[0].mxu0
    %v197 = vadd.f32 0.0, %v196
    %v198 = vpop.f32.mrb[0].mxu0
    %v199 = vpop.f32.mrb[0].mxu0
    %v200 = vpop.f32.mrb[0].mxu0
    %201 = vdwg.mxu0
    %v202 = vadd.f32 %v154, %v197
    %v203 = vxor.u32 %v202, 2147483648
    %v204 = vmul.f32 %v203, 1.442695
    %v205 = vpow.pop %v204
    %v206 = vadd.f32 %v205, 1.0
    %v207 = vrcp.pop %v206
    %v208 = vmul.f32 1.0, %v207
    %v209 = vtanh.pop %v202
    %v210 = vmul.f32 %v208, %v141
    %212 = vrot.lane.b32.xlu0 %v209, 64
    %v213 = vpop.permute.xlu0 %212
    %v215 = vmul.f32 %v208, %v213
    %217 = vrot.lane.b32.xlu0 %v215, 32
    %v218 = vpop.permute.xlu0 %217
    %v220 = vadd.f32 %v210, %v218
    %v221 = vtanh.pop %v220
    %223 = vrot.lane.b32.xlu0 %v221, 64
    %v224 = vpop.permute.xlu0 %223
    %v226 = vmul.f32 %v208, %v224
    %s227 = sld [smem:[#allocation3 + $0x2]]
    %p228 = scmp.gt.s32.totalorder %s227, 0
    %s229 = scalar_select %p228, %s227, 0
    %p230 = scmp.lt.s32.totalorder %s229, 26
    %s231 = scalar_select %p230, %s229, 26
    %s232 = scalar_lea.vmem [#allocation5], %s231
    %v233 = vld [vmem:[%s232] sm:$0x1]
    %v234 = vpack.c.bf16 %v226, %v226
    %236 = vrot.lane.b32.xlu0 %v234, 32
    %v237 = vpop.permute.xlu0 %236
    %v239 = vsel %vm79, %v237, 0
    %241 = vmatprep.subr.bf16.mxu0 0
    %242 = vmatpush1.bf16.msra.mxu0 %v75
    %243 = vmatprep.subr.bf16.mxu0 0
    %244 = vmatpush1.bf16.msra.mxu0 %v76
    %245 = vmatprep.subr.bf16.mxu0 0
    %246 = vmatpush1.bf16.msra.mxu0 0
    %247 = vmatprep.subr.bf16.mxu0 0
    %248 = vmatpush1.bf16.msra.mxu0 0
    %249 = vmatprep.subr.bf16.mxu0 0
    %250 = vmatpush1.bf16.msra.mxu0 0
    %251 = vmatprep.subr.bf16.mxu0 0
    %252 = vmatpush1.bf16.msra.mxu0 0
    %253 = vmatprep.subr.bf16.mxu0 0
    %254 = vmatpush1.bf16.msra.mxu0 0
    %255 = vmatprep.subr.bf16.mxu0 0
    %256 = vmatpush1.bf16.msra.mxu0 0
    %257 = vmatprep.subr.bf16.mxu0 0
    %258 = vmatpush1.bf16.msra.mxu0 0
    %259 = vmatprep.subr.bf16.mxu0 0
    %260 = vmatpush1.bf16.msra.mxu0 0
    %261 = vmatprep.subr.bf16.mxu0 0
    %262 = vmatpush1.bf16.msra.mxu0 0
    %263 = vmatprep.subr.bf16.mxu0 0
    %264 = vmatpush1.bf16.msra.mxu0 0
    %265 = vmatprep.subr.bf16.mxu0 0
    %266 = vmatpush1.bf16.msra.mxu0 0
    %267 = vmatprep.subr.bf16.mxu0 0
    %268 = vmatpush1.bf16.msra.mxu0 0
    %269 = vmatprep.subr.bf16.mxu0 0
    %270 = vmatpush1.bf16.msra.mxu0 0
    %271 = vmatprep.subr.bf16.mxu0 0
    %272 = vmatpush1.bf16.msra.mxu0 0
    %273 = vmatprep.mubr.bf16.mxu0 0
    %274 = vmatmul.mubr.bf16.gmra.mrb[0].mxu0 %v239
    %v275 = vpop.f32.mrb[0].mxu0
    %v276 = vadd.f32 0.0, %v275
    %v277 = vpop.f32.mrb[0].mxu0
    %v278 = vpop.f32.mrb[0].mxu0
    %v279 = vpop.f32.mrb[0].mxu0
    %280 = vdwg.mxu0
    %v281 = vadd.f32 %v233, %v276
    %v282 = vxor.u32 %v281, 2147483648
    %v283 = vmul.f32 %v282, 1.442695
    %v284 = vpow.pop %v283
    %v285 = vadd.f32 %v284, 1.0
    %v286 = vrcp.pop %v285
    %v287 = vmul.f32 1.0, %v286
    %v288 = vtanh.pop %v281
    %v289 = vmul.f32 %v287, %v220
    %291 = vrot.lane.b32.xlu0 %v288, 64
    %v292 = vpop.permute.xlu0 %291
    %v294 = vmul.f32 %v287, %v292
    %296 = vrot.lane.b32.xlu0 %v294, 32
    %v297 = vpop.permute.xlu0 %296
    %v299 = vadd.f32 %v289, %v297
    %v300 = vtanh.pop %v299
    %302 = vrot.lane.b32.xlu0 %v300, 64
    %v303 = vpop.permute.xlu0 %302
    %v305 = vmul.f32 %v287, %v303
    %s306 = sld [smem:[#allocation3 + $0x3]]
    %p307 = scmp.gt.s32.totalorder %s306, 0
    %s308 = scalar_select %p307, %s306, 0
    %p309 = scmp.lt.s32.totalorder %s308, 26
    %s310 = scalar_select %p309, %s308, 26
    %s311 = scalar_lea.vmem [#allocation5], %s310
    %v312 = vld [vmem:[%s311] sm:$0x1]
    %v313 = vpack.c.bf16 %v305, %v305
    %315 = vrot.lane.b32.xlu0 %v313, 32
    %v316 = vpop.permute.xlu0 %315
    %v318 = vsel %vm79, %v316, 0
    %320 = vmatprep.subr.bf16.mxu0 0
    %321 = vmatpush1.bf16.msra.mxu0 %v75
    %322 = vmatprep.subr.bf16.mxu0 0
    %323 = vmatpush1.bf16.msra.mxu0 %v76
    %324 = vmatprep.subr.bf16.mxu0 0
    %325 = vmatpush1.bf16.msra.mxu0 0
    %326 = vmatprep.subr.bf16.mxu0 0
    %327 = vmatpush1.bf16.msra.mxu0 0
    %328 = vmatprep.subr.bf16.mxu0 0
    %329 = vmatpush1.bf16.msra.mxu0 0
    %330 = vmatprep.subr.bf16.mxu0 0
    %331 = vmatpush1.bf16.msra.mxu0 0
    %332 = vmatprep.subr.bf16.mxu0 0
    %333 = vmatpush1.bf16.msra.mxu0 0
    %334 = vmatprep.subr.bf16.mxu0 0
    %335 = vmatpush1.bf16.msra.mxu0 0
    %336 = vmatprep.subr.bf16.mxu0 0
    %337 = vmatpush1.bf16.msra.mxu0 0
    %338 = vmatprep.subr.bf16.mxu0 0
    %339 = vmatpush1.bf16.msra.mxu0 0
    %340 = vmatprep.subr.bf16.mxu0 0
    %341 = vmatpush1.bf16.msra.mxu0 0
    %342 = vmatprep.subr.bf16.mxu0 0
    %343 = vmatpush1.bf16.msra.mxu0 0
    %344 = vmatprep.subr.bf16.mxu0 0
    %345 = vmatpush1.bf16.msra.mxu0 0
    %346 = vmatprep.subr.bf16.mxu0 0
    %347 = vmatpush1.bf16.msra.mxu0 0
    %348 = vmatprep.subr.bf16.mxu0 0
    %349 = vmatpush1.bf16.msra.mxu0 0
    %350 = vmatprep.subr.bf16.mxu0 0
    %351 = vmatpush1.bf16.msra.mxu0 0
    %352 = vmatprep.mubr.bf16.mxu0 0
    %353 = vmatmul.mubr.bf16.gmra.mrb[0].mxu0 %v318
    %v354 = vpop.f32.mrb[0].mxu0
    %v355 = vadd.f32 0.0, %v354
    %v356 = vpop.f32.mrb[0].mxu0
    %v357 = vpop.f32.mrb[0].mxu0
    %v358 = vpop.f32.mrb[0].mxu0
    %359 = vdwg.mxu0
    %v360 = vadd.f32 %v312, %v355
    %v361 = vxor.u32 %v360, 2147483648
    %v362 = vmul.f32 %v361, 1.442695
    %v363 = vpow.pop %v362
    %v364 = vadd.f32 %v363, 1.0
    %v365 = vrcp.pop %v364
    %v366 = vmul.f32 1.0, %v365
    %v367 = vtanh.pop %v360
    %v368 = vmul.f32 %v366, %v299
    %370 = vrot.lane.b32.xlu0 %v367, 64
    %v371 = vpop.permute.xlu0 %370
    %v373 = vmul.f32 %v366, %v371
    %375 = vrot.lane.b32.xlu0 %v373, 32
    %v376 = vpop.permute.xlu0 %375
    %v378 = vadd.f32 %v368, %v376
    %v379 = vtanh.pop %v378
    %381 = vrot.lane.b32.xlu0 %v379, 64
    %v382 = vpop.permute.xlu0 %381
    %v384 = vmul.f32 %v366, %v382
    %s385 = sld [smem:[#allocation3 + $0x4]]
    %p386 = scmp.gt.s32.totalorder %s385, 0
    %s387 = scalar_select %p386, %s385, 0
    %p388 = scmp.lt.s32.totalorder %s387, 26
    %s389 = scalar_select %p388, %s387, 26
    %s390 = scalar_lea.vmem [#allocation5], %s389
    %v391 = vld [vmem:[%s390] sm:$0x1]
    %v392 = vpack.c.bf16 %v384, %v384
    %394 = vrot.lane.b32.xlu0 %v392, 32
    %v395 = vpop.permute.xlu0 %394
    %v397 = vsel %vm79, %v395, 0
    %399 = vmatprep.subr.bf16.mxu0 0
    %400 = vmatpush1.bf16.msra.mxu0 %v75
    %401 = vmatprep.subr.bf16.mxu0 0
    %402 = vmatpush1.bf16.msra.mxu0 %v76
    %403 = vmatprep.subr.bf16.mxu0 0
    %404 = vmatpush1.bf16.msra.mxu0 0
    %405 = vmatprep.subr.bf16.mxu0 0
    %406 = vmatpush1.bf16.msra.mxu0 0
    %407 = vmatprep.subr.bf16.mxu0 0
    %408 = vmatpush1.bf16.msra.mxu0 0
    %409 = vmatprep.subr.bf16.mxu0 0
    %410 = vmatpush1.bf16.msra.mxu0 0
    %411 = vmatprep.subr.bf16.mxu0 0
    %412 = vmatpush1.bf16.msra.mxu0 0
    %413 = vmatprep.subr.bf16.mxu0 0
    %414 = vmatpush1.bf16.msra.mxu0 0
    %415 = vmatprep.subr.bf16.mxu0 0
    %416 = vmatpush1.bf16.msra.mxu0 0
    %417 = vmatprep.subr.bf16.mxu0 0
    %418 = vmatpush1.bf16.msra.mxu0 0
    %419 = vmatprep.subr.bf16.mxu0 0
    %420 = vmatpush1.bf16.msra.mxu0 0
    %421 = vmatprep.subr.bf16.mxu0 0
    %422 = vmatpush1.bf16.msra.mxu0 0
    %423 = vmatprep.subr.bf16.mxu0 0
    %424 = vmatpush1.bf16.msra.mxu0 0
    %425 = vmatprep.subr.bf16.mxu0 0
    %426 = vmatpush1.bf16.msra.mxu0 0
    %427 = vmatprep.subr.bf16.mxu0 0
    %428 = vmatpush1.bf16.msra.mxu0 0
    %429 = vmatprep.subr.bf16.mxu0 0
    %430 = vmatpush1.bf16.msra.mxu0 0
    %431 = vmatprep.mubr.bf16.mxu0 0
    %432 = vmatmul.mubr.bf16.gmra.mrb[0].mxu0 %v397
    %v433 = vpop.f32.mrb[0].mxu0
    %v434 = vadd.f32 0.0, %v433
    %v435 = vpop.f32.mrb[0].mxu0
    %v436 = vpop.f32.mrb[0].mxu0
    %v437 = vpop.f32.mrb[0].mxu0
    %438 = vdwg.mxu0
    %v439 = vadd.f32 %v391, %v434
    %v440 = vxor.u32 %v439, 2147483648
    %v441 = vmul.f32 %v440, 1.442695
    %v442 = vpow.pop %v441
    %v443 = vadd.f32 %v442, 1.0
    %v444 = vrcp.pop %v443
    %v445 = vmul.f32 1.0, %v444
    %v446 = vtanh.pop %v439
    %v447 = vmul.f32 %v445, %v378
    %449 = vrot.lane.b32.xlu0 %v446, 64
    %v450 = vpop.permute.xlu0 %449
    %v452 = vmul.f32 %v445, %v450
    %454 = vrot.lane.b32.xlu0 %v452, 32
    %v455 = vpop.permute.xlu0 %454
    %v457 = vadd.f32 %v447, %v455
    %v458 = vtanh.pop %v457
    %460 = vrot.lane.b32.xlu0 %v458, 64
    %v461 = vpop.permute.xlu0 %460
    %v463 = vmul.f32 %v445, %v461
    %s464 = sld [smem:[#allocation3 + $0x5]]
    %p465 = scmp.gt.s32.totalorder %s464, 0
    %s466 = scalar_select %p465, %s464, 0
    %p467 = scmp.lt.s32.totalorder %s466, 26
    %s468 = scalar_select %p467, %s466, 26
    %s469 = scalar_lea.vmem [#allocation5], %s468
    %v470 = vld [vmem:[%s469] sm:$0x1]
    %v471 = vpack.c.bf16 %v463, %v463
    %473 = vrot.lane.b32.xlu0 %v471, 32
    %v474 = vpop.permute.xlu0 %473
    %v476 = vsel %vm79, %v474, 0
    %478 = vmatprep.subr.bf16.mxu0 0
    %479 = vmatpush1.bf16.msra.mxu0 %v75
    %480 = vmatprep.subr.bf16.mxu0 0
    %481 = vmatpush1.bf16.msra.mxu0 %v76
    %482 = vmatprep.subr.bf16.mxu0 0
    %483 = vmatpush1.bf16.msra.mxu0 0
    %484 = vmatprep.subr.bf16.mxu0 0
    %485 = vmatpush1.bf16.msra.mxu0 0
    %486 = vmatprep.subr.bf16.mxu0 0
    %487 = vmatpush1.bf16.msra.mxu0 0
    %488 = vmatprep.subr.bf16.mxu0 0
    %489 = vmatpush1.bf16.msra.mxu0 0
    %490 = vmatprep.subr.bf16.mxu0 0
    %491 = vmatpush1.bf16.msra.mxu0 0
    %492 = vmatprep.subr.bf16.mxu0 0
    %493 = vmatpush1.bf16.msra.mxu0 0
    %494 = vmatprep.subr.bf16.mxu0 0
    %495 = vmatpush1.bf16.msra.mxu0 0
    %496 = vmatprep.subr.bf16.mxu0 0
    %497 = vmatpush1.bf16.msra.mxu0 0
    %498 = vmatprep.subr.bf16.mxu0 0
    %499 = vmatpush1.bf16.msra.mxu0 0
    %500 = vmatprep.subr.bf16.mxu0 0
    %501 = vmatpush1.bf16.msra.mxu0 0
    %502 = vmatprep.subr.bf16.mxu0 0
    %503 = vmatpush1.bf16.msra.mxu0 0
    %504 = vmatprep.subr.bf16.mxu0 0
    %505 = vmatpush1.bf16.msra.mxu0 0
    %506 = vmatprep.subr.bf16.mxu0 0
    %507 = vmatpush1.bf16.msra.mxu0 0
    %508 = vmatprep.subr.bf16.mxu0 0
    %509 = vmatpush1.bf16.msra.mxu0 0
    %510 = vmatprep.mubr.bf16.mxu0 0
    %511 = vmatmul.mubr.bf16.gmra.mrb[0].mxu0 %v476
    %v512 = vpop.f32.mrb[0].mxu0
    %v513 = vadd.f32 0.0, %v512
    %v514 = vpop.f32.mrb[0].mxu0
    %v515 = vpop.f32.mrb[0].mxu0
    %v516 = vpop.f32.mrb[0].mxu0
    %517 = vdwg.mxu0
    %v518 = vadd.f32 %v470, %v513
    %v519 = vxor.u32 %v518, 2147483648
    %v520 = vmul.f32 %v519, 1.442695
    %v521 = vpow.pop %v520
    %v522 = vadd.f32 %v521, 1.0
    %v523 = vrcp.pop %v522
    %v524 = vmul.f32 1.0, %v523
    %v525 = vtanh.pop %v518
    %v526 = vmul.f32 %v524, %v457
    %528 = vrot.lane.b32.xlu0 %v525, 64
    %v529 = vpop.permute.xlu0 %528
    %v531 = vmul.f32 %v524, %v529
    %533 = vrot.lane.b32.xlu0 %v531, 32
    %v534 = vpop.permute.xlu0 %533
    %v536 = vadd.f32 %v526, %v534
    %v537 = vtanh.pop %v536
    %539 = vrot.lane.b32.xlu0 %v537, 64
    %v540 = vpop.permute.xlu0 %539
    %v542 = vmul.f32 %v524, %v540
    %s543 = sld [smem:[#allocation3 + $0x6]]
    %p544 = scmp.gt.s32.totalorder %s543, 0
    %s545 = scalar_select %p544, %s543, 0
    %p546 = scmp.lt.s32.totalorder %s545, 26
    %s547 = scalar_select %p546, %s545, 26
    %s548 = scalar_lea.vmem [#allocation5], %s547
    %v549 = vld [vmem:[%s548] sm:$0x1]
    %v550 = vpack.c.bf16 %v542, %v542
    %552 = vrot.lane.b32.xlu0 %v550, 32
    %v553 = vpop.permute.xlu0 %552
    %v555 = vsel %vm79, %v553, 0
    %557 = vmatprep.subr.bf16.mxu0 0
    %558 = vmatpush1.bf16.msra.mxu0 %v75
    %559 = vmatprep.subr.bf16.mxu0 0
    %560 = vmatpush1.bf16.msra.mxu0 %v76
    %561 = vmatprep.subr.bf16.mxu0 0
    %562 = vmatpush1.bf16.msra.mxu0 0
    %563 = vmatprep.subr.bf16.mxu0 0
    %564 = vmatpush1.bf16.msra.mxu0 0
    %565 = vmatprep.subr.bf16.mxu0 0
    %566 = vmatpush1.bf16.msra.mxu0 0
    %567 = vmatprep.subr.bf16.mxu0 0
    %568 = vmatpush1.bf16.msra.mxu0 0
    %569 = vmatprep.subr.bf16.mxu0 0
    %570 = vmatpush1.bf16.msra.mxu0 0
    %571 = vmatprep.subr.bf16.mxu0 0
    %572 = vmatpush1.bf16.msra.mxu0 0
    %573 = vmatprep.subr.bf16.mxu0 0
    %574 = vmatpush1.bf16.msra.mxu0 0
    %575 = vmatprep.subr.bf16.mxu0 0
    %576 = vmatpush1.bf16.msra.mxu0 0
    %577 = vmatprep.subr.bf16.mxu0 0
    %578 = vmatpush1.bf16.msra.mxu0 0
    %579 = vmatprep.subr.bf16.mxu0 0
    %580 = vmatpush1.bf16.msra.mxu0 0
    %581 = vmatprep.subr.bf16.mxu0 0
    %582 = vmatpush1.bf16.msra.mxu0 0
    %583 = vmatprep.subr.bf16.mxu0 0
    %584 = vmatpush1.bf16.msra.mxu0 0
    %585 = vmatprep.subr.bf16.mxu0 0
    %586 = vmatpush1.bf16.msra.mxu0 0
    %587 = vmatprep.subr.bf16.mxu0 0
    %588 = vmatpush1.bf16.msra.mxu0 0
    %589 = vmatprep.mubr.bf16.mxu0 0
    %590 = vmatmul.mubr.bf16.gmra.mrb[0].mxu0 %v555
    %v591 = vpop.f32.mrb[0].mxu0
    %v592 = vadd.f32 0.0, %v591
    %v593 = vpop.f32.mrb[0].mxu0
    %v594 = vpop.f32.mrb[0].mxu0
    %v595 = vpop.f32.mrb[0].mxu0
    %596 = vdwg.mxu0
    %v597 = vadd.f32 %v549, %v592
    %v598 = vxor.u32 %v597, 2147483648
    %v599 = vmul.f32 %v598, 1.442695
    %v600 = vpow.pop %v599
    %v601 = vadd.f32 %v600, 1.0
    %v602 = vrcp.pop %v601
    %v603 = vmul.f32 1.0, %v602
    %v604 = vtanh.pop %v597
    %v605 = vmul.f32 %v603, %v536
    %607 = vrot.lane.b32.xlu0 %v604, 64
    %v608 = vpop.permute.xlu0 %607
    %v610 = vmul.f32 %v603, %v608
    %612 = vrot.lane.b32.xlu0 %v610, 32
    %v613 = vpop.permute.xlu0 %612
    %v615 = vadd.f32 %v605, %v613
    %v616 = vtanh.pop %v615
    %618 = vrot.lane.b32.xlu0 %v616, 64
    %v619 = vpop.permute.xlu0 %618
    %v621 = vmul.f32 %v603, %v619
    %s622 = sld [smem:[#allocation3 + $0x7]]
    %p623 = scmp.gt.s32.totalorder %s622, 0
    %s624 = scalar_select %p623, %s622, 0
    %p625 = scmp.lt.s32.totalorder %s624, 26
    %s626 = scalar_select %p625, %s624, 26
    %s627 = scalar_lea.vmem [#allocation5], %s626
    %v628 = vld [vmem:[%s627] sm:$0x1]
    %v629 = vpack.c.bf16 %v621, %v621
    %631 = vrot.lane.b32.xlu0 %v629, 32
    %v632 = vpop.permute.xlu0 %631
    %v634 = vsel %vm79, %v632, 0
    %636 = vmatprep.subr.bf16.mxu0 0
    %637 = vmatpush1.bf16.msra.mxu0 %v75
    %638 = vmatprep.subr.bf16.mxu0 0
    %639 = vmatpush1.bf16.msra.mxu0 %v76
    %640 = vmatprep.subr.bf16.mxu0 0
    %641 = vmatpush1.bf16.msra.mxu0 0
    %642 = vmatprep.subr.bf16.mxu0 0
    %643 = vmatpush1.bf16.msra.mxu0 0
    %644 = vmatprep.subr.bf16.mxu0 0
    %645 = vmatpush1.bf16.msra.mxu0 0
    %646 = vmatprep.subr.bf16.mxu0 0
    %647 = vmatpush1.bf16.msra.mxu0 0
    %648 = vmatprep.subr.bf16.mxu0 0
    %649 = vmatpush1.bf16.msra.mxu0 0
    %650 = vmatprep.subr.bf16.mxu0 0
    %651 = vmatpush1.bf16.msra.mxu0 0
    %652 = vmatprep.subr.bf16.mxu0 0
    %653 = vmatpush1.bf16.msra.mxu0 0
    %654 = vmatprep.subr.bf16.mxu0 0
    %655 = vmatpush1.bf16.msra.mxu0 0
    %656 = vmatprep.subr.bf16.mxu0 0
    %657 = vmatpush1.bf16.msra.mxu0 0
    %658 = vmatprep.subr.bf16.mxu0 0
    %659 = vmatpush1.bf16.msra.mxu0 0
    %660 = vmatprep.subr.bf16.mxu0 0
    %661 = vmatpush1.bf16.msra.mxu0 0
    %662 = vmatprep.subr.bf16.mxu0 0
    %663 = vmatpush1.bf16.msra.mxu0 0
    %664 = vmatprep.subr.bf16.mxu0 0
    %665 = vmatpush1.bf16.msra.mxu0 0
    %666 = vmatprep.subr.bf16.mxu0 0
    %667 = vmatpush1.bf16.msra.mxu0 0
    %668 = vmatprep.mubr.bf16.mxu0 0
    %669 = vmatmul.mubr.bf16.gmra.mrb[0].mxu0 %v634
    %v670 = vpop.f32.mrb[0].mxu0
    %v671 = vadd.f32 0.0, %v670
    %v672 = vpop.f32.mrb[0].mxu0
    %v673 = vpop.f32.mrb[0].mxu0
    %v674 = vpop.f32.mrb[0].mxu0
    %675 = vdwg.mxu0
    %v676 = vadd.f32 %v628, %v671
    %v677 = vxor.u32 %v676, 2147483648
    %v678 = vmul.f32 %v677, 1.442695
    %v679 = vpow.pop %v678
    %v680 = vadd.f32 %v679, 1.0
    %v681 = vrcp.pop %v680
    %v682 = vmul.f32 1.0, %v681
    %v683 = vtanh.pop %v676
    %v684 = vmul.f32 %v682, %v615
    %686 = vrot.lane.b32.xlu0 %v683, 64
    %v687 = vpop.permute.xlu0 %686
    %v689 = vmul.f32 %v682, %v687
    %691 = vrot.lane.b32.xlu0 %v689, 32
    %v692 = vpop.permute.xlu0 %691
    %v694 = vadd.f32 %v684, %v692
    %v695 = vtanh.pop %v694
    %697 = vrot.lane.b32.xlu0 %v695, 64
    %v698 = vpop.permute.xlu0 %697
    %v700 = vmul.f32 %v682, %v698
    %v701 = vld [vmem:[%s3] sm:$0x1]
    %v703 = vlaneseq
    %v704 = vshrl.u32 %v703, 7
    %v705 = vsub.s32 0, %v704
    %v706 = vrot.slane %v701, %v705
    %707 = vrot.lane.b32.xlu0 %v706, 96
    %v708 = vpop.permute.xlu0 %707
    %v710 = vmul.f32 %v700, %v708
    %712 = vrot.lane.b32.xlu0 %v710, 32
    %v713 = vpop.permute.xlu0 %712
    %vm715 = vcmask 253952
    %v716 = vsel %vm715, %v713, 0.0
    %717 = vadd.xlane.f32.xlu0 %v716
    %v718 = vpop.xlane.xlu0 %717
    %v719 = vld [vmem:[#allocation4] sm:$0x1]
    %v720 = vadd.f32 %v718, %v719
    %v721 = vxor.u32 %v720, 2147483648
    %v722 = vmul.f32 %v721, 1.442695
    %v723 = vpow.pop %v722
    %v724 = vadd.f32 %v723, 1.0
    %v725 = vrcp.pop %v724
    %v726 = vmul.f32 1.0, %v725
    %v727 = vsub.f32 1.0, %v726
    %729 = vrot.lane.b32.xlu0 %v727, 1
    %v730 = vpop.permute.xlu0 %729
    %vm732 = vcmask 7168
    %v733 = vsel %vm732, %v726, %v730
    %vm734 = vcmask 8192
    %735 = vst.msk [vmem:[#allocation10] sm:$0x1] %vm734, %v733
    // Predicated region
    $region26: #{tpu_custom_call.1} parent=1 // pred_check
      _
    $region27: #{tpu_custom_call.1} parent=1 // pred_check_branch
      %737 = sbr.rel (0) target = $region29
    $region28: #{tpu_custom_call.1} parent=1 // pred_region
      %s739 = ssub.s32 16, 16
      %740 = vsyncadd [#allocation7], %s739
      %s742 = sshll.u32 [#allocation10], 4
      %s743 = int_to_ptr.vmem [resolvable:$true] %s742
      %745 = dma.vmem_to_hbm [thread:$0]  %s743, 16, %s5, [#allocation7]
    $region29: #{tpu_custom_call.1} parent=1 // pred_fallthru
      _
    // Predicated region
    $region30: #{tpu_custom_call.1} parent=1 // pred_check
      _
    $region31: #{tpu_custom_call.1} parent=1 // pred_check_branch
      %747 = sbr.rel (0) target = $region33
    $region32: #{tpu_custom_call.1} parent=1 // pred_region
      %748 = dma.done [#allocation7], 16
    $region33: #{tpu_custom_call.1} parent=1 // pred_fallthru
      _
    %749 = vsyncpa [#allocation6], 1
    %750 = vsyncpa [#allocation9], 1
    %751 = vsyncpa [#allocation7], 1

</llo_original>
